<compile_context>
chip_gen: v6e
topology: v6e:2x2x1
jax: 0.10.0
libtpu: 0.0.40
codegen_flags: <defaults>
</compile_context>

<pallas_src>
import functools

import jax
import jax.numpy as jnp
from jax.experimental import pallas as pl
from jax.experimental.pallas import tpu as pltpu

HIDDEN_DIM = 32                 # PartEncoder(hidden_dim)
OUT_DIM = HIDDEN_DIM - 1        # PointNet(out_dim = hidden_dim - 1) = 31
H1, H2 = 64, 128                # per-point MLP widths
KPAD = 16                       # layer-1 contraction dim, padded 3 -> 16 (bf16 tile)
LANE = 128                      # lane-dense padded output width
TARGET_ROWS = 8192              # target matmul M-dim per grid step (v7x-safe)
MAX_PART_TILE = 1024            # hard cap on parts per grid step


# -----------------------------------------------------------------------------
# Pallas kernel: per-point MLP + max over points, for one tile of parts.
# x_ref:  (part_tile * N, KPAD) bf16  (coords zero-padded 3 -> KPAD)
# w1/b1:  (KPAD, 64) bf16 / (1, 64) f32
# w2/b2:  (64, 128)  bf16 / (1, 128) f32
# w3/b3:  (128, 128) bf16 / (1, 128) f32   (zero-padded beyond column 31)
# o_ref:  (part_tile, 128) f32             (lane-dense; wrapper slices cols)
# -----------------------------------------------------------------------------
def _pointnet_max_kernel(x_ref, w1_ref, b1_ref, w2_ref, b2_ref, w3_ref, b3_ref,
                         o_ref, *, n_points):
    rows = x_ref.shape[0]
    part_tile = rows // n_points

    # Layer 1 on the MXU (bf16 operands, f32 accumulate, f32 bias).
    h = jnp.dot(x_ref[...], w1_ref[...],
                preferred_element_type=jnp.float32) + b1_ref[...]
    # ReLU on bf16 vregs: relu(cast(x)) == cast(relu(x)), and the bf16 value is
    # exactly the next MXU operand.  Halves the VPU element-op count on
    # v6e/v7x; still correct (just slower) on v5e's f32 VPU.
    h = jnp.maximum(h.astype(jnp.bfloat16), 0)          # (rows, H1) bf16

    # Layer 2.
    h = jnp.dot(h, w2_ref[...],
                preferred_element_type=jnp.float32) + b2_ref[...]
    h = jnp.maximum(h.astype(jnp.bfloat16), 0)           # (rows, H2) bf16

    # Layer 3 (output zero-padded to 128 lanes -> unmasked vst writeback).
    h = jnp.dot(h, w3_ref[...],
                preferred_element_type=jnp.float32) + b3_ref[...]

    # max over the N points of each part (torch .max(dim=1)[0]).  N is padded
    # to a sublane multiple in the wrapper, so this reshape is a layout no-op.
    o_ref[...] = jnp.max(h.reshape(part_tile, n_points, LANE), axis=1)


def _choose_part_tile(num_parts, n_points):
    """Sublane-aligned part tile: ~TARGET_ROWS rows/step, >=2 grid steps."""
    parts_pad8 = ((num_parts + 7) // 8) * 8
    tile = max(8, (TARGET_ROWS // max(n_points, 1)) // 8 * 8)
    tile = min(tile, MAX_PART_TILE)
    # Keep at least 2 grid steps when there is enough work so v7x's two
    # TensorCores both get a share of the ("parallel",) grid axis.
    if parts_pad8 >= 16:
        tile = min(tile, max(8, (parts_pad8 // 2) // 8 * 8))
    return max(8, min(tile, parts_pad8))


def _prepare_kernel_params(params):
    """Pad layer-1 K to KPAD, layer-3 out to 128 lanes; cast MXU ops to bf16."""
    w1, b1, w2, b2, w3, b3 = params
    w1p = jnp.zeros((KPAD, H1), jnp.float32).at[:3, :].set(w1)
    w3p = jnp.zeros((H2, LANE), jnp.float32).at[:, :OUT_DIM].set(w3)
    b3p = jnp.zeros((1, LANE), jnp.float32).at[:, :OUT_DIM].set(b3)
    return (w1p.astype(jnp.bfloat16), b1,
            w2.astype(jnp.bfloat16), b2,
            w3p.astype(jnp.bfloat16), b3p)


def pointnet_encode_padded(pc_flat, params):
    """pc_flat: (P, N, 3) f32 -> (P, LANE) f32.

    Columns [:OUT_DIM] hold the max-pooled PointNet features; the remaining
    lanes are zero padding the caller may reuse (e.g. instance embedding).
    """
    P, N, _ = pc_flat.shape
    w1, b1, w2, b2, w3, b3 = _prepare_kernel_params(params)

    # Pad N to a sublane multiple with duplicated points (max-invariant), so
    # the in-kernel reshape before the reduce is a free layout no-op.
    pad_n = (-N) % 8
    if pad_n:
        last = jnp.broadcast_to(pc_flat[:, -1:, :], (P, pad_n, 3))
        pc_flat = jnp.concatenate([pc_flat, last], axis=1)
    Np = N + pad_n

    part_tile = _choose_part_tile(P, Np)
    pad_p = (-P) % part_tile
    if pad_p:
        pc_flat = jnp.pad(pc_flat, ((0, pad_p), (0, 0), (0, 0)))
    Pp = P + pad_p
    rows = part_tile * Np

    # Pre-flattened 2-D bf16 slab, coords zero-padded 3 -> KPAD for the MXU.
    x2d = jnp.pad(pc_flat.reshape(Pp * Np, 3),
                  ((0, 0), (0, KPAD - 3))).astype(jnp.bfloat16)

    flops = 2 * Pp * Np * (KPAD * H1 + H1 * H2 + H2 * LANE)
    bytes_accessed = (x2d.size * 2 + Pp * LANE * 4
                      + w1.size * 2 + b1.size * 4
                      + w2.size * 2 + b2.size * 4
                      + w3.size * 2 + b3.size * 4)

    kernel = functools.partial(_pointnet_max_kernel, n_points=Np)
    out = pl.pallas_call(
        kernel,
        out_shape=jax.ShapeDtypeStruct((Pp, LANE), jnp.float32),
        grid=(Pp // part_tile,),
        in_specs=[
            pl.BlockSpec((rows, KPAD), lambda i: (i, 0)),
            pl.BlockSpec((KPAD, H1), lambda i: (0, 0)),
            pl.BlockSpec((1, H1), lambda i: (0, 0)),
            pl.BlockSpec((H1, H2), lambda i: (0, 0)),
            pl.BlockSpec((1, H2), lambda i: (0, 0)),
            pl.BlockSpec((H2, LANE), lambda i: (0, 0)),
            pl.BlockSpec((1, LANE), lambda i: (0, 0)),
        ],
        out_specs=pl.BlockSpec((part_tile, LANE), lambda i: (i, 0)),
        compiler_params=pltpu.CompilerParams(
            dimension_semantics=("parallel",),
            vmem_limit_bytes=48 * 1024 * 1024),
        cost_estimate=pl.CostEstimate(
            flops=flops, transcendentals=0, bytes_accessed=bytes_accessed),
    )(x2d, w1, b1, w2, b2, w3, b3)

    return out[:P]   # drop padded parts; keep the 128 lane-padded columns


# -----------------------------------------------------------------------------
# Parameter init (deterministic, synthetic weights; master copy in f32).
# -----------------------------------------------------------------------------
def init_params(key):
    k1, k2, k3 = jax.random.split(key, 3)
    w1 = jax.random.normal(k1, (3, H1), jnp.float32) * (1.0 / jnp.sqrt(3.0))
    b1 = jnp.zeros((1, H1), jnp.float32)
    w2 = jax.random.normal(k2, (H1, H2), jnp.float32) * (1.0 / jnp.sqrt(H1))
    b2 = jnp.zeros((1, H2), jnp.float32)
    w3 = jax.random.normal(k3, (H2, OUT_DIM), jnp.float32) * (1.0 / jnp.sqrt(H2))
    b3 = jnp.zeros((1, OUT_DIM), jnp.float32)
    return (w1, b1, w2, b2, w3, b3)


# -----------------------------------------------------------------------------
# Pure-JAX reference for the PointNet path (f32 everywhere).
# -----------------------------------------------------------------------------
def pointnet_ref(pc_flat, params):
    w1, b1, w2, b2, w3, b3 = params
    h = jnp.maximum(jnp.einsum('pnc,ch->pnh', pc_flat, w1) + b1, 0.0)
    h = jnp.maximum(jnp.einsum('pnc,ch->pnh', h, w2) + b2, 0.0)
    h = jnp.einsum('pnc,ch->pnh', h, w3) + b3
    return jnp.max(h, axis=1)


# -----------------------------------------------------------------------------
# PartEncoder.forward
# -----------------------------------------------------------------------------
def part_encoder_forward(pc, params, key):
    """pc: (B, K, N, 3) f32 -> enc: (B, K, HIDDEN_DIM) f32."""
    B, K, N, _ = pc.shape
    out128 = pointnet_encode_padded(pc.reshape(B * K, N, 3), params)  # (B*K,128)

    # instance_embed[b] = randperm(K) + 1  (torch glue -> jax.random.permutation)
    perm_keys = jax.random.split(key, B)
    perms = jax.vmap(lambda k: jax.random.permutation(k, K))(perm_keys)
    inst = (perms.astype(jnp.float32) + 1.0).reshape(B * K)

    # Fold the instance embedding into the lane-padded kernel output: one
    # column write + one 32-wide slice instead of a 31-col slice + concat.
    out128 = out128.at[:, OUT_DIM].set(inst)
    return out128[:, :HIDDEN_DIM].reshape(B, K, HIDDEN_DIM)


if __name__ == "__main__":
    root = jax.random.PRNGKey(0)
    k_pc, k_params, k_perm = jax.random.split(root, 3)

    B, K, N = 2, 4, 16
    pc = jax.random.normal(k_pc, (B, K, N, 3), jnp.float32)
    params = init_params(k_params)

    enc = part_encoder_forward(pc, params, k_perm)
    enc = jax.block_until_ready(enc)

    assert enc.shape == (B, K, HIDDEN_DIM), enc.shape
    assert enc.dtype == jnp.float32

    # sanity: instance-embed column of each batch is a permutation of 1..K
    inst = jnp.sort(enc[:, :, -1], axis=1)
    assert bool(jnp.all(inst == jnp.arange(1, K + 1, dtype=jnp.float32)[None, :]))

    # numerics: kernel (bf16 coords + bf16 MXU operands, f32 accumulate)
    # vs. the all-f32 reference.
    ref = pointnet_ref(pc.reshape(B * K, N, 3), params)
    err = float(jnp.max(jnp.abs(enc[:, :, :OUT_DIM].reshape(B * K, OUT_DIM) - ref)))
    assert err < 1e-1, f"max abs error vs f32 reference: {err}"

    print("KERNEL_OK")
</pallas_src>

<mosaic_0001>
module attributes {stable_mosaic.version = 11 : i64} {
  func.func @_pointnet_max_kernel(%arg0: i32, %arg1: memref<128x16xbf16, #tpu.memory_space<vmem>>, %arg2: memref<16x64xbf16, #tpu.memory_space<vmem>>, %arg3: memref<1x64xf32, #tpu.memory_space<vmem>>, %arg4: memref<64x128xbf16, #tpu.memory_space<vmem>>, %arg5: memref<1x128xf32, #tpu.memory_space<vmem>>, %arg6: memref<128x128xbf16, #tpu.memory_space<vmem>>, %arg7: memref<1x128xf32, #tpu.memory_space<vmem>>, %arg8: memref<8x128xf32, #tpu.memory_space<vmem>>) attributes {dimension_semantics = [#tpu.dimension_semantics<parallel>], iteration_bounds = array<i64: 1>, scalar_prefetch = 0 : i64, scratch_operands = 0 : i64, tpu.core_type = #tpu.core_type<tc>, window_params = [{transform_indices = @transform_0, window_bounds = array<i64: 128, 16>}, {pipeline_mode = #tpu.pipeline_mode<synchronous>, transform_indices = @transform_1, window_bounds = array<i64: 16, 64>}, {pipeline_mode = #tpu.pipeline_mode<synchronous>, transform_indices = @transform_2, window_bounds = array<i64: 1, 64>}, {pipeline_mode = #tpu.pipeline_mode<synchronous>, transform_indices = @transform_3, window_bounds = array<i64: 64, 128>}, {pipeline_mode = #tpu.pipeline_mode<synchronous>, transform_indices = @transform_4, window_bounds = array<i64: 1, 128>}, {pipeline_mode = #tpu.pipeline_mode<synchronous>, transform_indices = @transform_5, window_bounds = array<i64: 128, 128>}, {pipeline_mode = #tpu.pipeline_mode<synchronous>, transform_indices = @transform_6, window_bounds = array<i64: 1, 128>}, {transform_indices = @transform_7, window_bounds = array<i64: 8, 128>}]} {
    %c0 = arith.constant 0 : index
    %c0_0 = arith.constant 0 : index
    %0 = vector.load %arg1[%c0, %c0_0] : memref<128x16xbf16, #tpu.memory_space<vmem>>, vector<128x16xbf16>
    %c0_1 = arith.constant 0 : index
    %c0_2 = arith.constant 0 : index
    %1 = vector.load %arg2[%c0_1, %c0_2] : memref<16x64xbf16, #tpu.memory_space<vmem>>, vector<16x64xbf16>
    %cst = arith.constant dense<0.000000e+00> : vector<128x64xf32>
    %2 = tpu.matmul %0, %1, %cst {dimension_numbers = #tpu.dot_dimension_numbers<[1], [0], [0], [1], [0, 0, 1, 1], [], []>} : vector<128x16xbf16>, vector<16x64xbf16>, vector<128x64xf32> -> vector<128x64xf32>
    %c0_3 = arith.constant 0 : index
    %c0_4 = arith.constant 0 : index
    %3 = vector.load %arg3[%c0_3, %c0_4] : memref<1x64xf32, #tpu.memory_space<vmem>>, vector<1x64xf32>
    %4 = vector.broadcast %3 : vector<1x64xf32> to vector<128x64xf32>
    %5 = arith.addf %2, %4 : vector<128x64xf32>
    %6 = arith.truncf %5 : vector<128x64xf32> to vector<128x64xbf16>
    %cst_5 = arith.constant 0.000000e+00 : bf16
    %7 = vector.broadcast %cst_5 : bf16 to vector<128x64xbf16>
    %8 = arith.maximumf %6, %7 : vector<128x64xbf16>
    %c0_6 = arith.constant 0 : index
    %c0_7 = arith.constant 0 : index
    %9 = vector.load %arg4[%c0_6, %c0_7] : memref<64x128xbf16, #tpu.memory_space<vmem>>, vector<64x128xbf16>
    %cst_8 = arith.constant dense<0.000000e+00> : vector<128x128xf32>
    %10 = tpu.matmul %8, %9, %cst_8 {dimension_numbers = #tpu.dot_dimension_numbers<[1], [0], [0], [1], [0, 0, 1, 1], [], []>} : vector<128x64xbf16>, vector<64x128xbf16>, vector<128x128xf32> -> vector<128x128xf32>
    %c0_9 = arith.constant 0 : index
    %c0_10 = arith.constant 0 : index
    %11 = vector.load %arg5[%c0_9, %c0_10] : memref<1x128xf32, #tpu.memory_space<vmem>>, vector<1x128xf32>
    %12 = vector.broadcast %11 : vector<1x128xf32> to vector<128x128xf32>
    %13 = arith.addf %10, %12 : vector<128x128xf32>
    %14 = arith.truncf %13 : vector<128x128xf32> to vector<128x128xbf16>
    %cst_11 = arith.constant 0.000000e+00 : bf16
    %15 = vector.broadcast %cst_11 : bf16 to vector<128x128xbf16>
    %16 = arith.maximumf %14, %15 : vector<128x128xbf16>
    %c0_12 = arith.constant 0 : index
    %c0_13 = arith.constant 0 : index
    %17 = vector.load %arg6[%c0_12, %c0_13] : memref<128x128xbf16, #tpu.memory_space<vmem>>, vector<128x128xbf16>
    %cst_14 = arith.constant dense<0.000000e+00> : vector<128x128xf32>
    %18 = tpu.matmul %16, %17, %cst_14 {dimension_numbers = #tpu.dot_dimension_numbers<[1], [0], [0], [1], [0, 0, 1, 1], [], []>} : vector<128x128xbf16>, vector<128x128xbf16>, vector<128x128xf32> -> vector<128x128xf32>
    %c0_15 = arith.constant 0 : index
    %c0_16 = arith.constant 0 : index
    %19 = vector.load %arg7[%c0_15, %c0_16] : memref<1x128xf32, #tpu.memory_space<vmem>>, vector<1x128xf32>
    %20 = vector.broadcast %19 : vector<1x128xf32> to vector<128x128xf32>
    %21 = arith.addf %18, %20 : vector<128x128xf32>
    %22 = vector.shape_cast %21 : vector<128x128xf32> to vector<8x16x128xf32>
    %cst_17 = arith.constant dense<0xFF800000> : vector<8x128xf32>
    %23 = vector.multi_reduction <maximumf>, %22, %cst_17 [1] : vector<8x16x128xf32> to vector<8x128xf32>
    %c0_18 = arith.constant 0 : index
    %c0_19 = arith.constant 0 : index
    %24 = vector.load %arg8[%c0_18, %c0_19] : memref<8x128xf32, #tpu.memory_space<vmem>>, vector<8x128xf32>
    tpu.vector_store %arg8[%c0_18, %c0_19], %23 {strides = array<i32>} : memref<8x128xf32, #tpu.memory_space<vmem>>, vector<8x128xf32>,
    return
  }
  func.func @transform_0(%arg0: i32) -> (i32, i32) {
    %c0_i32 = arith.constant 0 : i32
    %c0_i32_0 = arith.constant 0 : i32
    return %arg0, %c0_i32 : i32, i32
  }
  func.func @transform_1(%arg0: i32) -> (i32, i32) {
    %c0_i32 = arith.constant 0 : i32
    %c0_i32_0 = arith.constant 0 : i32
    %c0_i32_1 = arith.constant 0 : i32
    return %c0_i32, %c0_i32_0 : i32, i32
  }
  func.func @transform_2(%arg0: i32) -> (i32, i32) {
    %c0_i32 = arith.constant 0 : i32
    %c0_i32_0 = arith.constant 0 : i32
    %c0_i32_1 = arith.constant 0 : i32
    return %c0_i32, %c0_i32_0 : i32, i32
  }
  func.func @transform_3(%arg0: i32) -> (i32, i32) {
    %c0_i32 = arith.constant 0 : i32
    %c0_i32_0 = arith.constant 0 : i32
    %c0_i32_1 = arith.constant 0 : i32
    return %c0_i32, %c0_i32_0 : i32, i32
  }
  func.func @transform_4(%arg0: i32) -> (i32, i32) {
    %c0_i32 = arith.constant 0 : i32
    %c0_i32_0 = arith.constant 0 : i32
    %c0_i32_1 = arith.constant 0 : i32
    return %c0_i32, %c0_i32_0 : i32, i32
  }
  func.func @transform_5(%arg0: i32) -> (i32, i32) {
    %c0_i32 = arith.constant 0 : i32
    %c0_i32_0 = arith.constant 0 : i32
    %c0_i32_1 = arith.constant 0 : i32
    return %c0_i32, %c0_i32_0 : i32, i32
  }
  func.func @transform_6(%arg0: i32) -> (i32, i32) {
    %c0_i32 = arith.constant 0 : i32
    %c0_i32_0 = arith.constant 0 : i32
    %c0_i32_1 = arith.constant 0 : i32
    return %c0_i32, %c0_i32_0 : i32, i32
  }
  func.func @transform_7(%arg0: i32) -> (i32, i32) {
    %c0_i32 = arith.constant 0 : i32
    %c0_i32_0 = arith.constant 0 : i32
    return %arg0, %c0_i32 : i32, i32
  }
}

</mosaic_0001>

<llo_original>
// kernel: tpu_custom_call.1
$region0: #{tpu_custom_call.1}
  #allocation0 [shape = 'u32[]', space=smem, size = 0x4, offset = 0x4, fixed_abs, tag = 'smem constant byte address 0x4 - core index']
  #allocation1 [shape = 'u32[144,128]{1,0:T(1,128)}', space=vmem, size = 0x12000, scoped, tag = 'internal scratch']
  %s0 = inlined_call_operand.vmem [shape: bf16[128,16], index: 0, kind: input, shape index: {}]
  %s1 = inlined_call_operand.vmem [shape: bf16[16,64], index: 1, kind: input, shape index: {}]
  %s2 = inlined_call_operand.vmem [shape: f32[1,64], index: 2, kind: input, shape index: {}]
  %s3 = inlined_call_operand.hbm [shape: bf16[64,128], index: 3, kind: input, shape index: {}]
  %s4 = inlined_call_operand.vmem [shape: f32[1,128], index: 4, kind: input, shape index: {}]
  %s5 = inlined_call_operand.vmem [shape: bf16[128,128], index: 5, kind: input, shape index: {}]
  %s6 = inlined_call_operand.vmem [shape: f32[1,128], index: 6, kind: input, shape index: {}]
  %s7 = inlined_call_operand.hbm [shape: f32[8,128], index: 7, kind: output, shape index: {}]
  %s8 = sld [smem:[#allocation0]]
  $region42: #{tpu_custom_call.1} parent=0
    _
  %s10 = ssub.s32 1, %s8
  %s11 = scalar_select 0, %s10, %s8
  $region1: #{tpu_custom_call.1} parent=0
    #allocation2 [shape = 'u8[16384]{0}', space=vmem, size = 0x4000, scoped, tag = 'input window, operand 3, single buffered']
    #allocation3 [shape = 's32[1]{0}', space=sflag, size = 0x4, scoped, tag = 'scoped memory for tpu_custom_call.1']
    #allocation4 [shape = 's32[1]{0}', space=sflag, size = 0x4, scoped, tag = 'scoped memory for tpu_custom_call.1']
    #allocation5 [shape = 'u8[4096]{0}', space=vmem, size = 0x1000, scoped, tag = 'output window, operand 0, single buffered']
    %12 = vsyncpa [#allocation3], 0
    %13 = vsyncpa [#allocation4], 0
    // Predicated region
    $region2: #{tpu_custom_call.1} parent=1 // pred_check
      _
    $region3: #{tpu_custom_call.1} parent=1 // pred_check_branch
      %15 = sbr.rel (0) target = $region5
    $region4: #{tpu_custom_call.1} parent=1 // pred_region
      _
    $region5: #{tpu_custom_call.1} parent=1 // pred_fallthru
      _
    // Predicated region
    $region6: #{tpu_custom_call.1} parent=1 // pred_check
      _
    $region7: #{tpu_custom_call.1} parent=1 // pred_check_branch
      %17 = sbr.rel (0) target = $region9
    $region8: #{tpu_custom_call.1} parent=1 // pred_region
      _
    $region9: #{tpu_custom_call.1} parent=1 // pred_fallthru
      _
    // Predicated region
    $region10: #{tpu_custom_call.1} parent=1 // pred_check
      _
    $region11: #{tpu_custom_call.1} parent=1 // pred_check_branch
      %19 = sbr.rel (0) target = $region13
    $region12: #{tpu_custom_call.1} parent=1 // pred_region
      _
    $region13: #{tpu_custom_call.1} parent=1 // pred_fallthru
      _
    // Predicated region
    $region14: #{tpu_custom_call.1} parent=1 // pred_check
      _
    $region15: #{tpu_custom_call.1} parent=1 // pred_check_branch
      %21 = sbr.rel (0) target = $region17
    $region16: #{tpu_custom_call.1} parent=1 // pred_region
      %s23 = ssub.s32 512, 512
      %24 = vsyncadd [#allocation3], %s23
      %s25 = sshll.u32 [#allocation2], 4
      %s26 = int_to_ptr.vmem [resolvable:$true] %s25
      %31 = dma.hbm_to_vmem [thread:$0]  %s3, 512, %s26, [#allocation3], 64, 64, 4
    $region17: #{tpu_custom_call.1} parent=1 // pred_fallthru
      _
    // Predicated region
    $region18: #{tpu_custom_call.1} parent=1 // pred_check
      _
    $region19: #{tpu_custom_call.1} parent=1 // pred_check_branch
      %33 = sbr.rel (0) target = $region21
    $region20: #{tpu_custom_call.1} parent=1 // pred_region
      _
    $region21: #{tpu_custom_call.1} parent=1 // pred_fallthru
      _
    // Predicated region
    $region22: #{tpu_custom_call.1} parent=1 // pred_check
      _
    $region23: #{tpu_custom_call.1} parent=1 // pred_check_branch
      %35 = sbr.rel (0) target = $region25
    $region24: #{tpu_custom_call.1} parent=1 // pred_region
      _
    $region25: #{tpu_custom_call.1} parent=1 // pred_fallthru
      _
    // Predicated region
    $region26: #{tpu_custom_call.1} parent=1 // pred_check
      _
    $region27: #{tpu_custom_call.1} parent=1 // pred_check_branch
      %37 = sbr.rel (0) target = $region29
    $region28: #{tpu_custom_call.1} parent=1 // pred_region
      _
    $region29: #{tpu_custom_call.1} parent=1 // pred_fallthru
      _
    // Predicated region
    $region30: #{tpu_custom_call.1} parent=1 // pred_check
      _
    $region31: #{tpu_custom_call.1} parent=1 // pred_check_branch
      %39 = sbr.rel (0) target = $region33
    $region32: #{tpu_custom_call.1} parent=1 // pred_region
      %40 = dma.done [#allocation3], 512
    $region33: #{tpu_custom_call.1} parent=1 // pred_fallthru
      _
    %v42 = vld [vmem:[%s0] sm:$0xf]
    %v43 = vld [vmem:[%s0 + $0x4] sm:$0xf]
    %v44 = vld [vmem:[%s0 + $0x8] sm:$0xf]
    %v45 = vld [vmem:[%s0 + $0xc] sm:$0xf]
    %v46 = vld [vmem:[%s0 + $0x10] sm:$0xf]
    %v47 = vld [vmem:[%s0 + $0x14] sm:$0xf]
    %v48 = vld [vmem:[%s0 + $0x18] sm:$0xf]
    %v49 = vld [vmem:[%s0 + $0x1c] sm:$0xf]
    %v50 = vld [vmem:[%s0 + $0x20] sm:$0xf]
    %v51 = vld [vmem:[%s0 + $0x24] sm:$0xf]
    %v52 = vld [vmem:[%s0 + $0x28] sm:$0xf]
    %v53 = vld [vmem:[%s0 + $0x2c] sm:$0xf]
    %v54 = vld [vmem:[%s0 + $0x30] sm:$0xf]
    %v55 = vld [vmem:[%s0 + $0x34] sm:$0xf]
    %v56 = vld [vmem:[%s0 + $0x38] sm:$0xf]
    %v57 = vld [vmem:[%s0 + $0x3c] sm:$0xf]
    %v58 = vld [vmem:[%s1] sm:$0xf]
    %v59 = vld [vmem:[%s1 + $0x4] sm:$0xf]
    %v60 = vld [vmem:[%s2] sm:$0x1]
    %v62 = vlaneseq
    %v63 = vshrl.u32 %v62, 7
    %v64 = vsub.s32 0, %v63
    %v65 = vrot.slane %v60, %v64
    %v83 = vunpack.c.l.b16 %v42
    %v84 = vunpack.c.l.b16 %v43
    %v85 = vunpack.c.l.b16 %v44
    %v86 = vunpack.c.l.b16 %v45
    %v87 = vunpack.c.l.b16 %v46
    %v88 = vunpack.c.l.b16 %v47
    %v89 = vunpack.c.l.b16 %v48
    %v90 = vunpack.c.l.b16 %v49
    %v91 = vunpack.c.l.b16 %v50
    %v92 = vunpack.c.l.b16 %v51
    %v93 = vunpack.c.l.b16 %v52
    %v94 = vunpack.c.l.b16 %v53
    %v95 = vunpack.c.l.b16 %v54
    %v96 = vunpack.c.l.b16 %v55
    %v97 = vunpack.c.l.b16 %v56
    %v98 = vunpack.c.l.b16 %v57
    %v99 = vpack.c.b16 %v84, %v83
    %v100 = vpack.c.b16 %v86, %v85
    %v101 = vpack.c.b16 %v88, %v87
    %v102 = vpack.c.b16 %v90, %v89
    %v103 = vpack.c.b16 %v92, %v91
    %v104 = vpack.c.b16 %v94, %v93
    %v105 = vpack.c.b16 %v96, %v95
    %v106 = vpack.c.b16 %v98, %v97
    %v109 = vunpack.c.l.b16 %v58
    %v110 = vunpack.c.l.b16 %v59
    %v111 = vpack.c.b16 %v110, %v109
    %vm113 = vcmask 130048
    %v115 = vsel %vm113, %v99, 0
    %v118 = vsel %vm113, %v100, 0
    %v121 = vsel %vm113, %v101, 0
    %v124 = vsel %vm113, %v102, 0
    %v127 = vsel %vm113, %v103, 0
    %v130 = vsel %vm113, %v104, 0
    %v133 = vsel %vm113, %v105, 0
    %v136 = vsel %vm113, %v106, 0
    %138 = vmatprep.subr.bf16.mxu0 0
    %139 = vmatpush1.bf16.msra.mxu0 0
    %140 = vmatprep.subr.bf16.mxu0 0
    %141 = vmatpush1.bf16.msra.mxu0 0
    %142 = vmatprep.subr.bf16.mxu0 0
    %143 = vmatpush1.bf16.msra.mxu0 0
    %144 = vmatprep.subr.bf16.mxu0 0
    %145 = vmatpush1.bf16.msra.mxu0 0
    %146 = vmatprep.subr.bf16.mxu0 0
    %147 = vmatpush1.bf16.msra.mxu0 0
    %148 = vmatprep.subr.bf16.mxu0 0
    %149 = vmatpush1.bf16.msra.mxu0 0
    %150 = vmatprep.subr.bf16.mxu0 0
    %151 = vmatpush1.bf16.msra.mxu0 0
    %152 = vmatprep.subr.bf16.mxu0 0
    %153 = vmatpush1.bf16.msra.mxu0 %v111
    %154 = vmatprep.subr.bf16.mxu0 0
    %155 = vmatpush2.bf16.msra.mxu0 0
    %156 = vmatprep.subr.bf16.mxu0 0
    %157 = vmatpush2.bf16.msra.mxu0 0
    %158 = vmatprep.subr.bf16.mxu0 0
    %159 = vmatpush2.bf16.msra.mxu0 0
    %160 = vmatprep.subr.bf16.mxu0 0
    %161 = vmatpush2.bf16.msra.mxu0 0
    %162 = vmatprep.subr.bf16.mxu0 0
    %163 = vmatpush2.bf16.msra.mxu0 0
    %164 = vmatprep.subr.bf16.mxu0 0
    %165 = vmatpush2.bf16.msra.mxu0 0
    %166 = vmatprep.subr.bf16.mxu0 0
    %167 = vmatpush2.bf16.msra.mxu0 0
    %168 = vmatprep.subr.bf16.mxu0 0
    %169 = vmatpush2.bf16.msra.mxu0 0
    %170 = vmatprep.mubr.bf16.mxu0 0
    %171 = vmatmul.mubr.bf16.gmra.mxu0 %v115
    %v172 = vpop.f32.mrf.mxu0
    %v173 = vadd.f32 %v65, %v172
    %v174 = vpop.f32.mrf.mxu0
    %v175 = vpop.f32.mrf.mxu0
    %v176 = vadd.f32 %v65, %v175
    %v177 = vpop.f32.mrf.mxu0
    %178 = vmatprep.mubr.bf16.mxu0 0
    %179 = vmatmul.mubr.bf16.gmra.mxu0 %v118
    %v180 = vpop.f32.mrf.mxu0
    %v181 = vadd.f32 %v65, %v180
    %v182 = vpop.f32.mrf.mxu0
    %v183 = vpop.f32.mrf.mxu0
    %v184 = vadd.f32 %v65, %v183
    %v185 = vpop.f32.mrf.mxu0
    %186 = vmatprep.mubr.bf16.mxu0 0
    %187 = vmatmul.mubr.bf16.gmra.mxu0 %v121
    %v188 = vpop.f32.mrf.mxu0
    %v189 = vadd.f32 %v65, %v188
    %v190 = vpop.f32.mrf.mxu0
    %v191 = vpop.f32.mrf.mxu0
    %v192 = vadd.f32 %v65, %v191
    %v193 = vpop.f32.mrf.mxu0
    %194 = vmatprep.mubr.bf16.mxu0 0
    %195 = vmatmul.mubr.bf16.gmra.mxu0 %v124
    %v196 = vpop.f32.mrf.mxu0
    %v197 = vadd.f32 %v65, %v196
    %v198 = vpop.f32.mrf.mxu0
    %v199 = vpop.f32.mrf.mxu0
    %v200 = vadd.f32 %v65, %v199
    %v201 = vpop.f32.mrf.mxu0
    %202 = vmatprep.mubr.bf16.mxu0 0
    %203 = vmatmul.mubr.bf16.gmra.mxu0 %v127
    %v204 = vpop.f32.mrf.mxu0
    %v205 = vadd.f32 %v65, %v204
    %v206 = vpop.f32.mrf.mxu0
    %v207 = vpop.f32.mrf.mxu0
    %v208 = vadd.f32 %v65, %v207
    %v209 = vpop.f32.mrf.mxu0
    %210 = vmatprep.mubr.bf16.mxu0 0
    %211 = vmatmul.mubr.bf16.gmra.mxu0 %v130
    %v212 = vpop.f32.mrf.mxu0
    %v213 = vadd.f32 %v65, %v212
    %v214 = vpop.f32.mrf.mxu0
    %v215 = vpop.f32.mrf.mxu0
    %v216 = vadd.f32 %v65, %v215
    %v217 = vpop.f32.mrf.mxu0
    %218 = vmatprep.mubr.bf16.mxu0 0
    %219 = vmatmul.mubr.bf16.gmra.mxu0 %v133
    %v220 = vpop.f32.mrf.mxu0
    %v221 = vadd.f32 %v65, %v220
    %v222 = vpop.f32.mrf.mxu0
    %v223 = vpop.f32.mrf.mxu0
    %v224 = vadd.f32 %v65, %v223
    %v225 = vpop.f32.mrf.mxu0
    %226 = vmatprep.mubr.bf16.mxu0 0
    %227 = vmatmul.mubr.bf16.gmra.mxu0 %v136
    %v228 = vpop.f32.mrf.mxu0
    %v229 = vadd.f32 %v65, %v228
    %v230 = vpop.f32.mrf.mxu0
    %v231 = vpop.f32.mrf.mxu0
    %v232 = vadd.f32 %v65, %v231
    %v233 = vpop.f32.mrf.mxu0
    %234 = vdwg.mxu0
    %v235 = vpack.c.bf16 %v176, %v173
    %v236 = vpack.c.bf16 %v184, %v181
    %v237 = vpack.c.bf16 %v192, %v189
    %v238 = vpack.c.bf16 %v200, %v197
    %v239 = vpack.c.bf16 %v208, %v205
    %v240 = vpack.c.bf16 %v216, %v213
    %v241 = vpack.c.bf16 %v224, %v221
    %v242 = vpack.c.bf16 %v232, %v229
    %v243 = vmax.bf16 %v235, 0
    %v244 = vmax.bf16 %v236, 0
    %v245 = vmax.bf16 %v237, 0
    %v246 = vmax.bf16 %v238, 0
    %v247 = vmax.bf16 %v239, 0
    %v248 = vmax.bf16 %v240, 0
    %v249 = vmax.bf16 %v241, 0
    %v250 = vmax.bf16 %v242, 0
    %v251 = vld [vmem:[#allocation2] sm:$0xf]
    %v252 = vld [vmem:[#allocation2 + $0x4] sm:$0xf]
    %v253 = vld [vmem:[#allocation2 + $0x8] sm:$0xf]
    %v254 = vld [vmem:[#allocation2 + $0xc] sm:$0xf]
    %v255 = vld [vmem:[#allocation2 + $0x10] sm:$0xf]
    %v256 = vld [vmem:[#allocation2 + $0x14] sm:$0xf]
    %v257 = vld [vmem:[#allocation2 + $0x18] sm:$0xf]
    %v258 = vld [vmem:[#allocation2 + $0x1c] sm:$0xf]
    %v259 = vld [vmem:[%s4] sm:$0x1]
    %v261 = vlaneseq
    %v262 = vshrl.u32 %v261, 7
    %v263 = vsub.s32 0, %v262
    %v264 = vrot.slane %v259, %v263
    %v274 = vunpack.c.l.b16 %v251
    %v275 = vunpack.c.l.b16 %v252
    %v276 = vunpack.c.l.b16 %v253
    %v277 = vunpack.c.l.b16 %v254
    %v278 = vunpack.c.l.b16 %v255
    %v279 = vunpack.c.l.b16 %v256
    %v280 = vunpack.c.l.b16 %v257
    %v281 = vunpack.c.l.b16 %v258
    %v282 = vpack.c.b16 %v275, %v274
    %v283 = vpack.c.b16 %v277, %v276
    %v284 = vpack.c.b16 %v279, %v278
    %v285 = vpack.c.b16 %v281, %v280
    %vm290 = vcmask 523264
    %v292 = vsel %vm290, %v243, 0
    %v295 = vsel %vm290, %v244, 0
    %v298 = vsel %vm290, %v245, 0
    %v301 = vsel %vm290, %v246, 0
    %v304 = vsel %vm290, %v247, 0
    %v307 = vsel %vm290, %v248, 0
    %v310 = vsel %vm290, %v249, 0
    %v313 = vsel %vm290, %v250, 0
    %315 = vmatprep.subr.bf16.mxu0 0
    %316 = vmatpush1.bf16.msra.mxu0 0
    %317 = vmatprep.subr.bf16.mxu0 0
    %318 = vmatpush1.bf16.msra.mxu0 0
    %319 = vmatprep.subr.bf16.mxu0 0
    %320 = vmatpush1.bf16.msra.mxu0 0
    %321 = vmatprep.subr.bf16.mxu0 0
    %322 = vmatpush1.bf16.msra.mxu0 0
    %323 = vmatprep.subr.bf16.mxu0 0
    %324 = vmatpush1.bf16.msra.mxu0 %v285
    %325 = vmatprep.subr.bf16.mxu0 0
    %326 = vmatpush1.bf16.msra.mxu0 %v284
    %327 = vmatprep.subr.bf16.mxu0 0
    %328 = vmatpush1.bf16.msra.mxu0 %v283
    %329 = vmatprep.subr.bf16.mxu0 0
    %330 = vmatpush1.bf16.msra.mxu0 %v282
    %331 = vmatprep.subr.bf16.mxu0 0
    %332 = vmatpush2.bf16.msra.mxu0 0
    %333 = vmatprep.subr.bf16.mxu0 0
    %334 = vmatpush2.bf16.msra.mxu0 0
    %335 = vmatprep.subr.bf16.mxu0 0
    %336 = vmatpush2.bf16.msra.mxu0 0
    %337 = vmatprep.subr.bf16.mxu0 0
    %338 = vmatpush2.bf16.msra.mxu0 0
    %339 = vmatprep.subr.bf16.mxu0 0
    %340 = vmatpush2.bf16.msra.mxu0 0
    %341 = vmatprep.subr.bf16.mxu0 0
    %342 = vmatpush2.bf16.msra.mxu0 0
    %343 = vmatprep.subr.bf16.mxu0 0
    %344 = vmatpush2.bf16.msra.mxu0 0
    %345 = vmatprep.subr.bf16.mxu0 0
    %346 = vmatpush2.bf16.msra.mxu0 0
    %347 = vmatprep.mubr.bf16.mxu0 0
    %348 = vmatmul.mubr.bf16.gmra.mxu0 %v292
    %v349 = vpop.f32.mrf.mxu0
    %v350 = vadd.f32 %v264, %v349
    %v351 = vpop.f32.mrf.mxu0
    %v352 = vpop.f32.mrf.mxu0
    %v353 = vadd.f32 %v264, %v352
    %v354 = vpop.f32.mrf.mxu0
    %355 = vmatprep.mubr.bf16.mxu0 0
    %356 = vmatmul.mubr.bf16.gmra.mxu0 %v295
    %v357 = vpop.f32.mrf.mxu0
    %v358 = vadd.f32 %v264, %v357
    %v359 = vpop.f32.mrf.mxu0
    %v360 = vpop.f32.mrf.mxu0
    %v361 = vadd.f32 %v264, %v360
    %v362 = vpop.f32.mrf.mxu0
    %363 = vmatprep.mubr.bf16.mxu0 0
    %364 = vmatmul.mubr.bf16.gmra.mxu0 %v298
    %v365 = vpop.f32.mrf.mxu0
    %v366 = vadd.f32 %v264, %v365
    %v367 = vpop.f32.mrf.mxu0
    %v368 = vpop.f32.mrf.mxu0
    %v369 = vadd.f32 %v264, %v368
    %v370 = vpop.f32.mrf.mxu0
    %371 = vmatprep.mubr.bf16.mxu0 0
    %372 = vmatmul.mubr.bf16.gmra.mxu0 %v301
    %v373 = vpop.f32.mrf.mxu0
    %v374 = vadd.f32 %v264, %v373
    %v375 = vpop.f32.mrf.mxu0
    %v376 = vpop.f32.mrf.mxu0
    %v377 = vadd.f32 %v264, %v376
    %v378 = vpop.f32.mrf.mxu0
    %379 = vmatprep.mubr.bf16.mxu0 0
    %380 = vmatmul.mubr.bf16.gmra.mxu0 %v304
    %v381 = vpop.f32.mrf.mxu0
    %v382 = vadd.f32 %v264, %v381
    %v383 = vpop.f32.mrf.mxu0
    %v384 = vpop.f32.mrf.mxu0
    %v385 = vadd.f32 %v264, %v384
    %v386 = vpop.f32.mrf.mxu0
    %387 = vmatprep.mubr.bf16.mxu0 0
    %388 = vmatmul.mubr.bf16.gmra.mxu0 %v307
    %v389 = vpop.f32.mrf.mxu0
    %v390 = vadd.f32 %v264, %v389
    %v391 = vpop.f32.mrf.mxu0
    %v392 = vpop.f32.mrf.mxu0
    %v393 = vadd.f32 %v264, %v392
    %v394 = vpop.f32.mrf.mxu0
    %395 = vmatprep.mubr.bf16.mxu0 0
    %396 = vmatmul.mubr.bf16.gmra.mxu0 %v310
    %v397 = vpop.f32.mrf.mxu0
    %v398 = vadd.f32 %v264, %v397
    %v399 = vpop.f32.mrf.mxu0
    %v400 = vpop.f32.mrf.mxu0
    %v401 = vadd.f32 %v264, %v400
    %v402 = vpop.f32.mrf.mxu0
    %403 = vmatprep.mubr.bf16.mxu0 0
    %404 = vmatmul.mubr.bf16.gmra.mxu0 %v313
    %v405 = vpop.f32.mrf.mxu0
    %v406 = vadd.f32 %v264, %v405
    %v407 = vpop.f32.mrf.mxu0
    %v408 = vpop.f32.mrf.mxu0
    %v409 = vadd.f32 %v264, %v408
    %v410 = vpop.f32.mrf.mxu0
    %411 = vdwg.mxu0
    %v412 = vpack.c.bf16 %v353, %v350
    %v413 = vpack.c.bf16 %v361, %v358
    %v414 = vpack.c.bf16 %v369, %v366
    %v415 = vpack.c.bf16 %v377, %v374
    %v416 = vpack.c.bf16 %v385, %v382
    %v417 = vpack.c.bf16 %v393, %v390
    %v418 = vpack.c.bf16 %v401, %v398
    %v419 = vpack.c.bf16 %v409, %v406
    %v420 = vmax.bf16 %v412, 0
    %v421 = vmax.bf16 %v413, 0
    %v422 = vmax.bf16 %v414, 0
    %v423 = vmax.bf16 %v415, 0
    %v424 = vmax.bf16 %v416, 0
    %v425 = vmax.bf16 %v417, 0
    %v426 = vmax.bf16 %v418, 0
    %v427 = vmax.bf16 %v419, 0
    %v428 = vld [vmem:[%s5] sm:$0xf]
    %v429 = vld [vmem:[%s5 + $0x4] sm:$0xf]
    %v430 = vld [vmem:[%s5 + $0x8] sm:$0xf]
    %v431 = vld [vmem:[%s5 + $0xc] sm:$0xf]
    %v432 = vld [vmem:[%s5 + $0x10] sm:$0xf]
    %v433 = vld [vmem:[%s5 + $0x14] sm:$0xf]
    %v434 = vld [vmem:[%s5 + $0x18] sm:$0xf]
    %v435 = vld [vmem:[%s5 + $0x1c] sm:$0xf]
    %v436 = vld [vmem:[%s5 + $0x20] sm:$0xf]
    %v437 = vld [vmem:[%s5 + $0x24] sm:$0xf]
    %v438 = vld [vmem:[%s5 + $0x28] sm:$0xf]
    %v439 = vld [vmem:[%s5 + $0x2c] sm:$0xf]
    %v440 = vld [vmem:[%s5 + $0x30] sm:$0xf]
    %v441 = vld [vmem:[%s5 + $0x34] sm:$0xf]
    %v442 = vld [vmem:[%s5 + $0x38] sm:$0xf]
    %v443 = vld [vmem:[%s5 + $0x3c] sm:$0xf]
    %v444 = vld [vmem:[%s6] sm:$0x1]
    %v446 = vlaneseq
    %v447 = vshrl.u32 %v446, 7
    %v448 = vsub.s32 0, %v447
    %v449 = vrot.slane %v444, %v448
    %v467 = vunpack.c.l.b16 %v428
    %v468 = vunpack.c.l.b16 %v429
    %v469 = vunpack.c.l.b16 %v430
    %v470 = vunpack.c.l.b16 %v431
    %v471 = vunpack.c.l.b16 %v432
    %v472 = vunpack.c.l.b16 %v433
    %v473 = vunpack.c.l.b16 %v434
    %v474 = vunpack.c.l.b16 %v435
    %v475 = vunpack.c.l.b16 %v436
    %v476 = vunpack.c.l.b16 %v437
    %v477 = vunpack.c.l.b16 %v438
    %v478 = vunpack.c.l.b16 %v439
    %v479 = vunpack.c.l.b16 %v440
    %v480 = vunpack.c.l.b16 %v441
    %v481 = vunpack.c.l.b16 %v442
    %v482 = vunpack.c.l.b16 %v443
    %v483 = vpack.c.b16 %v468, %v467
    %v484 = vpack.c.b16 %v470, %v469
    %v485 = vpack.c.b16 %v472, %v471
    %v486 = vpack.c.b16 %v474, %v473
    %v487 = vpack.c.b16 %v476, %v475
    %v488 = vpack.c.b16 %v478, %v477
    %v489 = vpack.c.b16 %v480, %v479
    %v490 = vpack.c.b16 %v482, %v481
    %499 = vmatprep.subr.bf16.mxu0 0
    %500 = vmatpush1.bf16.msra.mxu0 %v490
    %501 = vmatprep.subr.bf16.mxu0 0
    %502 = vmatpush1.bf16.msra.mxu0 %v489
    %503 = vmatprep.subr.bf16.mxu0 0
    %504 = vmatpush1.bf16.msra.mxu0 %v488
    %505 = vmatprep.subr.bf16.mxu0 0
    %506 = vmatpush1.bf16.msra.mxu0 %v487
    %507 = vmatprep.subr.bf16.mxu0 0
    %508 = vmatpush1.bf16.msra.mxu0 %v486
    %509 = vmatprep.subr.bf16.mxu0 0
    %510 = vmatpush1.bf16.msra.mxu0 %v485
    %511 = vmatprep.subr.bf16.mxu0 0
    %512 = vmatpush1.bf16.msra.mxu0 %v484
    %513 = vmatprep.subr.bf16.mxu0 0
    %514 = vmatpush1.bf16.msra.mxu0 %v483
    %515 = vmatprep.subr.bf16.mxu0 0
    %516 = vmatpush2.bf16.msra.mxu0 0
    %517 = vmatprep.subr.bf16.mxu0 0
    %518 = vmatpush2.bf16.msra.mxu0 0
    %519 = vmatprep.subr.bf16.mxu0 0
    %520 = vmatpush2.bf16.msra.mxu0 0
    %521 = vmatprep.subr.bf16.mxu0 0
    %522 = vmatpush2.bf16.msra.mxu0 0
    %523 = vmatprep.subr.bf16.mxu0 0
    %524 = vmatpush2.bf16.msra.mxu0 0
    %525 = vmatprep.subr.bf16.mxu0 0
    %526 = vmatpush2.bf16.msra.mxu0 0
    %527 = vmatprep.subr.bf16.mxu0 0
    %528 = vmatpush2.bf16.msra.mxu0 0
    %529 = vmatprep.subr.bf16.mxu0 0
    %530 = vmatpush2.bf16.msra.mxu0 0
    %531 = vmatprep.mubr.bf16.mxu0 0
    %532 = vmatmul.mubr.bf16.gmra.mxu0 %v420
    %v533 = vpop.f32.mrf.mxu0
    %v534 = vadd.f32 %v449, %v533
    %v535 = vpop.f32.mrf.mxu0
    %v536 = vpop.f32.mrf.mxu0
    %v537 = vadd.f32 %v449, %v536
    %v538 = vpop.f32.mrf.mxu0
    %539 = vmatprep.mubr.bf16.mxu0 0
    %540 = vmatmul.mubr.bf16.gmra.mxu0 %v421
    %v541 = vpop.f32.mrf.mxu0
    %v542 = vadd.f32 %v449, %v541
    %v543 = vpop.f32.mrf.mxu0
    %v544 = vpop.f32.mrf.mxu0
    %v545 = vadd.f32 %v449, %v544
    %v546 = vpop.f32.mrf.mxu0
    %547 = vmatprep.mubr.bf16.mxu0 0
    %548 = vmatmul.mubr.bf16.gmra.mxu0 %v422
    %v549 = vpop.f32.mrf.mxu0
    %v550 = vadd.f32 %v449, %v549
    %v551 = vpop.f32.mrf.mxu0
    %v552 = vpop.f32.mrf.mxu0
    %v553 = vadd.f32 %v449, %v552
    %v554 = vpop.f32.mrf.mxu0
    %555 = vmatprep.mubr.bf16.mxu0 0
    %556 = vmatmul.mubr.bf16.gmra.mxu0 %v423
    %v557 = vpop.f32.mrf.mxu0
    %v558 = vadd.f32 %v449, %v557
    %v559 = vpop.f32.mrf.mxu0
    %v560 = vpop.f32.mrf.mxu0
    %v561 = vadd.f32 %v449, %v560
    %v562 = vpop.f32.mrf.mxu0
    %563 = vmatprep.mubr.bf16.mxu0 0
    %564 = vmatmul.mubr.bf16.gmra.mxu0 %v424
    %v565 = vpop.f32.mrf.mxu0
    %v566 = vadd.f32 %v449, %v565
    %v567 = vpop.f32.mrf.mxu0
    %v568 = vpop.f32.mrf.mxu0
    %v569 = vadd.f32 %v449, %v568
    %v570 = vpop.f32.mrf.mxu0
    %571 = vmatprep.mubr.bf16.mxu0 0
    %572 = vmatmul.mubr.bf16.gmra.mxu0 %v425
    %v573 = vpop.f32.mrf.mxu0
    %v574 = vadd.f32 %v449, %v573
    %v575 = vpop.f32.mrf.mxu0
    %v576 = vpop.f32.mrf.mxu0
    %v577 = vadd.f32 %v449, %v576
    %v578 = vpop.f32.mrf.mxu0
    %579 = vmatprep.mubr.bf16.mxu0 0
    %580 = vmatmul.mubr.bf16.gmra.mxu0 %v426
    %v581 = vpop.f32.mrf.mxu0
    %v582 = vadd.f32 %v449, %v581
    %v583 = vpop.f32.mrf.mxu0
    %v584 = vpop.f32.mrf.mxu0
    %v585 = vadd.f32 %v449, %v584
    %v586 = vpop.f32.mrf.mxu0
    %587 = vmatprep.mubr.bf16.mxu0 0
    %588 = vmatmul.mubr.bf16.gmra.mxu0 %v427
    %v589 = vpop.f32.mrf.mxu0
    %v590 = vadd.f32 %v449, %v589
    %v591 = vpop.f32.mrf.mxu0
    %v592 = vpop.f32.mrf.mxu0
    %v593 = vadd.f32 %v449, %v592
    %v594 = vpop.f32.mrf.mxu0
    %595 = vdwg.mxu0
    %v596 = vmax.f32 %v534, %v537
    %v597 = vrot.slane %v596, 4
    %v598 = vmax.f32 %v596, %v597
    %v599 = vrot.slane %v598, 2
    %v600 = vmax.f32 %v598, %v599
    %v601 = vrot.slane %v600, 1
    %v602 = vmax.f32 %v600, %v601
    %v603 = vmax.f32 %v542, %v545
    %v604 = vrot.slane %v603, 4
    %v605 = vmax.f32 %v603, %v604
    %v606 = vrot.slane %v605, 2
    %v607 = vmax.f32 %v605, %v606
    %v608 = vrot.slane %v607, 1
    %v609 = vmax.f32 %v607, %v608
    %v610 = vmax.f32 %v550, %v553
    %v611 = vrot.slane %v610, 4
    %v612 = vmax.f32 %v610, %v611
    %v613 = vrot.slane %v612, 2
    %v614 = vmax.f32 %v612, %v613
    %v615 = vrot.slane %v614, 1
    %v616 = vmax.f32 %v614, %v615
    %v617 = vmax.f32 %v558, %v561
    %v618 = vrot.slane %v617, 4
    %v619 = vmax.f32 %v617, %v618
    %v620 = vrot.slane %v619, 2
    %v621 = vmax.f32 %v619, %v620
    %v622 = vrot.slane %v621, 1
    %v623 = vmax.f32 %v621, %v622
    %v624 = vmax.f32 %v566, %v569
    %v625 = vrot.slane %v624, 4
    %v626 = vmax.f32 %v624, %v625
    %v627 = vrot.slane %v626, 2
    %v628 = vmax.f32 %v626, %v627
    %v629 = vrot.slane %v628, 1
    %v630 = vmax.f32 %v628, %v629
    %v631 = vmax.f32 %v574, %v577
    %v632 = vrot.slane %v631, 4
    %v633 = vmax.f32 %v631, %v632
    %v634 = vrot.slane %v633, 2
    %v635 = vmax.f32 %v633, %v634
    %v636 = vrot.slane %v635, 1
    %v637 = vmax.f32 %v635, %v636
    %v638 = vmax.f32 %v582, %v585
    %v639 = vrot.slane %v638, 4
    %v640 = vmax.f32 %v638, %v639
    %v641 = vrot.slane %v640, 2
    %v642 = vmax.f32 %v640, %v641
    %v643 = vrot.slane %v642, 1
    %v644 = vmax.f32 %v642, %v643
    %v645 = vmax.f32 %v590, %v593
    %v646 = vrot.slane %v645, 4
    %v647 = vmax.f32 %v645, %v646
    %v648 = vrot.slane %v647, 2
    %v649 = vmax.f32 %v647, %v648
    %v650 = vrot.slane %v649, 1
    %v651 = vmax.f32 %v649, %v650
    %vm660 = vcmask 1041409
    %v661 = vsel %vm660, %v609, %v602
    %vm662 = vcmask 1042434
    %v663 = vsel %vm662, %v616, %v661
    %vm664 = vcmask 1043459
    %v665 = vsel %vm664, %v623, %v663
    %vm666 = vcmask 1044484
    %v667 = vsel %vm666, %v630, %v665
    %vm668 = vcmask 1045509
    %v669 = vsel %vm668, %v637, %v667
    %vm670 = vcmask 1046534
    %v671 = vsel %vm670, %v644, %v669
    %vm672 = vcmask 1047559
    %v673 = vsel %vm672, %v651, %v671
    %675 = vst [vmem:[#allocation5] sm:$0xff] %v673
    // Predicated region
    $region34: #{tpu_custom_call.1} parent=1 // pred_check
      _
    $region35: #{tpu_custom_call.1} parent=1 // pred_check_branch
      %677 = sbr.rel (0) target = $region37
    $region36: #{tpu_custom_call.1} parent=1 // pred_region
      %s679 = ssub.s32 128, 128
      %680 = vsyncadd [#allocation4], %s679
      %s682 = sshll.u32 [#allocation5], 4
      %s683 = int_to_ptr.vmem [resolvable:$true] %s682
      %685 = dma.vmem_to_hbm [thread:$0]  %s683, 128, %s7, [#allocation4]
    $region37: #{tpu_custom_call.1} parent=1 // pred_fallthru
      _
    // Predicated region
    $region38: #{tpu_custom_call.1} parent=1 // pred_check
      _
    $region39: #{tpu_custom_call.1} parent=1 // pred_check_branch
      %687 = sbr.rel (0) target = $region41
    $region40: #{tpu_custom_call.1} parent=1 // pred_region
      %688 = dma.done [#allocation4], 128
    $region41: #{tpu_custom_call.1} parent=1 // pred_fallthru
      _
    %689 = vsyncpa [#allocation3], 1
    %690 = vsyncpa [#allocation4], 1

</llo_original>
